<compile_context>
chip_gen: v7x
topology: tpu7x:2x2x1
jax: 0.10.0
libtpu: 0.0.40
codegen_flags: <defaults>
</compile_context>

<pallas_src>
import functools

import jax
import jax.numpy as jnp
from jax.experimental import pallas as pl
from jax.experimental.pallas import tpu as pltpu


def _round_up(x: int, m: int) -> int:
    return (x + m - 1) // m * m


def _cdiv(a: int, b: int) -> int:
    return -(-a // b)


# If D1+D2 is at most this, use the combined (single-dot) kernel.
_COMBINED_MAX_K = 256


def _combined_kernel(x1_ref, x2_ref, w_ref, o_ref, xcat_ref, *, d1, d2):
    """Small-K path: concat x1|x2 into a VMEM scratch, one MXU dot."""
    xcat_ref[:, :d1] = x1_ref[...]
    xcat_ref[:, d1:d1 + d2] = x2_ref[...]
    o_ref[...] = jnp.dot(
        xcat_ref[...], w_ref[...],
        preferred_element_type=jnp.float32).astype(o_ref.dtype)


def _split_kernel(x1_ref, x2_ref, w1_ref, w2_ref, o_ref):
    """Large-K path: two partial products summed in-register, one grid step."""
    acc = jnp.dot(x1_ref[...], w1_ref[...], preferred_element_type=jnp.float32)
    acc = acc + jnp.dot(x2_ref[...], w2_ref[...],
                        preferred_element_type=jnp.float32)
    o_ref[...] = acc.astype(o_ref.dtype)


def prepare_params(weight: jax.Array, input_dim1: int,
                   compute_dtype=jnp.bfloat16):
    """One-time parameter prep (hoisted out of the forward path).

    weight: (O, D1 + D2) in PyTorch nn.Linear layout.
    Returns either a 1-tuple (W_T,) with W_T:(D1+D2, O_pad) for the small-K
    combined-dot kernel, or a 2-tuple (W1, W2) with W1:(D1, O_pad),
    W2:(D2, O_pad) for the split kernel.  O is padded to a multiple of 128 so
    output tiles are lane-dense; weights are cast to `compute_dtype`
    (bf16 is MXU-native on v6e/v7x; accumulation stays f32 in the kernel).
    """
    out_dim, d_total = weight.shape
    o_pad = _round_up(out_dim, 128)
    w_t = weight.T.astype(compute_dtype)            # (D1 + D2, O)
    if o_pad != out_dim:
        w_t = jnp.pad(w_t, ((0, 0), (0, o_pad - out_dim)))
    if d_total <= _COMBINED_MAX_K:
        return (w_t,)
    return (w_t[:input_dim1], w_t[input_dim1:])


@functools.partial(jax.jit, static_argnames=("out_dim",))
def two_input_nn(x1: jax.Array, x2: jax.Array, *weights, out_dim: int):
    """Equivalent of TwoInputNN.forward.

    x1: (B, D1), x2: (B, D2); `weights` is the tuple from prepare_params.
    Returns (B, out_dim) in x1's dtype.
    """
    batch, d1 = x1.shape
    batch2, d2 = x2.shape
    assert batch2 == batch
    d_total = d1 + d2

    combined = len(weights) == 1
    if combined:
        (w,) = weights
        assert w.shape[0] == d_total
        o_pad = w.shape[1]
    else:
        w1, w2 = weights
        assert w1.shape[0] == d1 and w2.shape[0] == d2
        o_pad = w1.shape[1]
        assert w2.shape[1] == o_pad
    assert o_pad % 128 == 0 and o_pad >= out_dim

    out_dtype = x1.dtype
    cd = weights[0].dtype                            # compute dtype (f32 or bf16)
    cd_size = jnp.dtype(cd).itemsize
    out_size = jnp.dtype(out_dtype).itemsize

    # --- tile selection ------------------------------------------------------
    def ws_bytes(tm, tn):
        x_b = 2 * tm * d_total * cd_size             # x1+x2 tiles, double-buffered
        w_b = 2 * d_total * tn * cd_size             # weight tiles, double-buffered
        o_b = 2 * tm * tn * out_size                 # output tile, double-buffered
        s_b = tm * d_total * cd_size if combined else 0
        return x_b + w_b + o_b + s_b

    budget = 40 << 20                                # headroom on v7x (64 MiB VMEM)

    tm = min(512, _round_up(batch, 8))
    tn_candidates = []
    if o_pad <= 512:
        tn_candidates.append(o_pad)                  # weights DMA'd exactly once
    if o_pad % 256 == 0:
        tn_candidates.append(256)
    tn_candidates.append(128)
    tn = next((c for c in tn_candidates if ws_bytes(tm, c) <= budget),
              tn_candidates[-1])
    while ws_bytes(tm, tn) > budget and tm > 8:
        tm = max(8, _round_up(tm // 2, 8))
    b_pad = _round_up(batch, tm)

    # v7x megacore: try to guarantee >= 2 "parallel" grid points.
    if (b_pad // tm) * (o_pad // tn) == 1:
        if o_pad // 128 >= 2:
            tn = 128
        else:
            half_tm = _round_up(_cdiv(batch, 2), 8)
            if half_tm < tm:
                tm = half_tm
                b_pad = _round_up(batch, tm)

    # --- cast / pad activations ----------------------------------------------
    if x1.dtype != cd:
        x1 = x1.astype(cd)
    if x2.dtype != cd:
        x2 = x2.astype(cd)
    if b_pad != batch:
        x1 = jnp.pad(x1, ((0, b_pad - batch), (0, 0)))
        x2 = jnp.pad(x2, ((0, b_pad - batch), (0, 0)))

    grid = (b_pad // tm, o_pad // tn)
    n_i, n_j = grid

    # Cost estimate reflecting actual traffic (weights re-streamed per batch
    # tile only when the N axis is tiled).
    flops = 2 * b_pad * d_total * o_pad
    weight_reads = d_total * o_pad * cd_size * (n_i if n_j > 1 else 1)
    bytes_accessed = (b_pad * d_total * cd_size + weight_reads
                      + b_pad * o_pad * out_size)

    x_specs = [pl.BlockSpec((tm, d1), lambda i, j: (i, 0)),
               pl.BlockSpec((tm, d2), lambda i, j: (i, 0))]
    out_spec = pl.BlockSpec((tm, tn), lambda i, j: (i, j))
    compiler_params = pltpu.CompilerParams(
        dimension_semantics=("parallel", "parallel"),
        vmem_limit_bytes=int(min(max(2 * ws_bytes(tm, tn), 16 << 20), 48 << 20)))
    cost = pl.CostEstimate(flops=flops, transcendentals=0,
                           bytes_accessed=bytes_accessed)

    if combined:
        kernel = functools.partial(_combined_kernel, d1=d1, d2=d2)
        out = pl.pallas_call(
            kernel,
            out_shape=jax.ShapeDtypeStruct((b_pad, o_pad), out_dtype),
            grid=grid,
            in_specs=x_specs + [pl.BlockSpec((d_total, tn), lambda i, j: (0, j))],
            out_specs=out_spec,
            scratch_shapes=[pltpu.VMEM((tm, d_total), cd)],
            compiler_params=compiler_params,
            cost_estimate=cost,
        )(x1, x2, w)
    else:
        out = pl.pallas_call(
            _split_kernel,
            out_shape=jax.ShapeDtypeStruct((b_pad, o_pad), out_dtype),
            grid=grid,
            in_specs=x_specs + [pl.BlockSpec((d1, tn), lambda i, j: (0, j)),
                                pl.BlockSpec((d2, tn), lambda i, j: (0, j))],
            out_specs=out_spec,
            compiler_params=compiler_params,
            cost_estimate=cost,
        )(x1, x2, w1, w2)

    # Strip padding only when padding was actually added.
    if b_pad != batch or o_pad != out_dim:
        out = out[:batch, :out_dim]
    return out


if __name__ == "__main__":
    # Small shapes consistent with the module: two feature vectors per example.
    B, D1, D2, O = 8, 16, 16, 32

    key = jax.random.PRNGKey(0)
    k1, k2, kw = jax.random.split(key, 3)
    x1 = jax.random.normal(k1, (B, D1), dtype=jnp.float32)
    x2 = jax.random.normal(k2, (B, D2), dtype=jnp.float32)
    # nn.Linear weight layout (O, D1 + D2), no bias.
    weight = jax.random.normal(kw, (O, D1 + D2), dtype=jnp.float32) * 0.05
    ref = jnp.concatenate([x1, x2], axis=-1) @ weight.T

    # --- f32 compute (tight check); exercises the combined small-K kernel. ---
    params_f32 = jax.block_until_ready(prepare_params(weight, D1, jnp.float32))
    out = jax.block_until_ready(two_input_nn(x1, x2, *params_f32, out_dim=O))
    assert out.shape == (B, O), out.shape
    assert jnp.allclose(out, ref, atol=1e-5, rtol=1e-5)

    # --- bf16 compute (MXU-native on v6e/v7x), f32 accumulation. -------------
    params_bf16 = jax.block_until_ready(prepare_params(weight, D1, jnp.bfloat16))
    out_bf16 = jax.block_until_ready(two_input_nn(x1, x2, *params_bf16, out_dim=O))
    assert out_bf16.shape == (B, O)
    assert jnp.allclose(out_bf16, ref, atol=3e-2, rtol=3e-2)

    # --- larger features: exercises the split-weight kernel path. ------------
    B2, E1, E2, O2 = 32, 160, 200, 96
    j1, j2, jw = jax.random.split(jax.random.PRNGKey(1), 3)
    y1 = jax.random.normal(j1, (B2, E1), dtype=jnp.float32)
    y2 = jax.random.normal(j2, (B2, E2), dtype=jnp.float32)
    weight2 = jax.random.normal(jw, (O2, E1 + E2), dtype=jnp.float32) * 0.05
    params2 = jax.block_until_ready(prepare_params(weight2, E1, jnp.float32))
    out2 = jax.block_until_ready(two_input_nn(y1, y2, *params2, out_dim=O2))
    ref2 = jnp.concatenate([y1, y2], axis=-1) @ weight2.T
    assert out2.shape == (B2, O2)
    assert jnp.allclose(out2, ref2, atol=1e-4, rtol=1e-4)

    print("KERNEL_OK")
</pallas_src>

<mosaic_0001>
module attributes {stable_mosaic.version = 11 : i64} {
  func.func @_combined_kernel(%arg0: i32, %arg1: i32, %arg2: memref<8x16xf32, #tpu.memory_space<vmem>>, %arg3: memref<8x16xf32, #tpu.memory_space<vmem>>, %arg4: memref<32x128xf32, #tpu.memory_space<vmem>>, %arg5: memref<8x128xf32, #tpu.memory_space<vmem>>, %arg6: memref<8x32xf32, #tpu.memory_space<vmem>>) attributes {dimension_semantics = [#tpu.dimension_semantics<parallel>, #tpu.dimension_semantics<parallel>], iteration_bounds = array<i64: 1, 1>, scalar_prefetch = 0 : i64, scratch_operands = 1 : i64, tpu.core_type = #tpu.core_type<tc>, window_params = [{transform_indices = @transform_0, window_bounds = array<i64: 8, 16>}, {transform_indices = @transform_1, window_bounds = array<i64: 8, 16>}, {transform_indices = @transform_2, window_bounds = array<i64: 32, 128>}, {transform_indices = @transform_3, window_bounds = array<i64: 8, 128>}]} {
    %c0 = arith.constant 0 : index
    %c0_0 = arith.constant 0 : index
    %0 = vector.load %arg2[%c0, %c0_0] : memref<8x16xf32, #tpu.memory_space<vmem>>, vector<8x16xf32>
    %c0_1 = arith.constant 0 : index
    %c0_2 = arith.constant 0 : index
    %1 = vector.load %arg6[%c0_1, %c0_2] : memref<8x32xf32, #tpu.memory_space<vmem>>, vector<8x16xf32>
    tpu.vector_store %arg6[%c0_1, %c0_2], %0 {strides = array<i32>} : memref<8x32xf32, #tpu.memory_space<vmem>>, vector<8x16xf32>,
    %c0_3 = arith.constant 0 : index
    %c0_4 = arith.constant 0 : index
    %2 = vector.load %arg3[%c0_3, %c0_4] : memref<8x16xf32, #tpu.memory_space<vmem>>, vector<8x16xf32>
    %c0_5 = arith.constant 0 : index
    %c16 = arith.constant 16 : index
    %3 = vector.load %arg6[%c0_5, %c16] : memref<8x32xf32, #tpu.memory_space<vmem>>, vector<8x16xf32>
    tpu.vector_store %arg6[%c0_5, %c16], %2 {strides = array<i32>} : memref<8x32xf32, #tpu.memory_space<vmem>>, vector<8x16xf32>,
    %c0_6 = arith.constant 0 : index
    %c0_7 = arith.constant 0 : index
    %4 = vector.load %arg6[%c0_6, %c0_7] : memref<8x32xf32, #tpu.memory_space<vmem>>, vector<8x32xf32>
    %c0_8 = arith.constant 0 : index
    %c0_9 = arith.constant 0 : index
    %5 = vector.load %arg4[%c0_8, %c0_9] : memref<32x128xf32, #tpu.memory_space<vmem>>, vector<32x128xf32>
    %cst = arith.constant dense<0.000000e+00> : vector<8x128xf32>
    %6 = tpu.matmul %4, %5, %cst {dimension_numbers = #tpu.dot_dimension_numbers<[1], [0], [0], [1], [0, 0, 1, 1], [], []>} : vector<8x32xf32>, vector<32x128xf32>, vector<8x128xf32> -> vector<8x128xf32>
    %c0_10 = arith.constant 0 : index
    %c0_11 = arith.constant 0 : index
    %7 = vector.load %arg5[%c0_10, %c0_11] : memref<8x128xf32, #tpu.memory_space<vmem>>, vector<8x128xf32>
    tpu.vector_store %arg5[%c0_10, %c0_11], %6 {strides = array<i32>} : memref<8x128xf32, #tpu.memory_space<vmem>>, vector<8x128xf32>,
    return
  }
  func.func @transform_0(%arg0: i32, %arg1: i32) -> (i32, i32) {
    %c0_i32 = arith.constant 0 : i32
    %c0_i32_0 = arith.constant 0 : i32
    return %arg0, %c0_i32 : i32, i32
  }
  func.func @transform_1(%arg0: i32, %arg1: i32) -> (i32, i32) {
    %c0_i32 = arith.constant 0 : i32
    %c0_i32_0 = arith.constant 0 : i32
    return %arg0, %c0_i32 : i32, i32
  }
  func.func @transform_2(%arg0: i32, %arg1: i32) -> (i32, i32) {
    %c0_i32 = arith.constant 0 : i32
    %c0_i32_0 = arith.constant 0 : i32
    return %c0_i32, %arg1 : i32, i32
  }
  func.func @transform_3(%arg0: i32, %arg1: i32) -> (i32, i32) {
    %c0_i32 = arith.constant 0 : i32
    return %arg0, %arg1 : i32, i32
  }
}

</mosaic_0001>

<llo_original>
// kernel: two_input_nn.1
$region0: #{two_input_nn.1}
  #allocation0 [shape = 'u32[]', space=smem, size = 0x4, offset = 0x4, fixed_abs, tag = 'smem constant byte address 0x4 - core index']
  #allocation1 [shape = 'u32[144,128]{1,0:T(1,128)}', space=vmem, size = 0x12000, scoped, tag = 'internal scratch']
  #allocation2 [shape = 'f32[8,32]{1,0:T(8,128)}', space=vmem, size = 0x1000, scoped, tag = 'scratch operand']
  %s0 = inlined_call_operand.hbm [shape: f32[8,16], index: 0, kind: input, shape index: {}]
  %s1 = inlined_call_operand.hbm [shape: f32[8,16], index: 1, kind: input, shape index: {}]
  %s2 = inlined_call_operand.hbm [shape: f32[32,128], index: 2, kind: input, shape index: {}]
  %s3 = inlined_call_operand.hbm [shape: f32[8,128], index: 3, kind: output, shape index: {}]
  %s4 = sld [smem:[#allocation0]]
  $region34: #{two_input_nn.1} parent=0
    _
  %s6 = ssub.s32 1, %s4
  %s7 = scalar_select 0, %s6, %s4
  $region1: #{two_input_nn.1} parent=0
    #allocation3 [shape = 'u8[4096]{0}', space=vmem, size = 0x1000, scoped, tag = 'input window, operand 0, single buffered']
    #allocation4 [shape = 's32[1]{0}', space=sflag, size = 0x4, scoped, tag = 'scoped memory for two_input_nn.1']
    #allocation5 [shape = 's32[1]{0}', space=sflag, size = 0x4, scoped, tag = 'scoped memory for two_input_nn.1']
    #allocation6 [shape = 'u8[4096]{0}', space=vmem, size = 0x1000, scoped, tag = 'input window, operand 1, single buffered']
    #allocation7 [shape = 's32[1]{0}', space=sflag, size = 0x4, scoped, tag = 'scoped memory for two_input_nn.1']
    #allocation8 [shape = 'u8[16384]{0}', space=vmem, size = 0x4000, scoped, tag = 'input window, operand 2, single buffered']
    #allocation9 [shape = 'u8[4096]{0}', space=vmem, size = 0x1000, scoped, tag = 'output window, operand 0, single buffered']
    %8 = vsyncpa [#allocation4], 0
    %9 = vsyncpa [#allocation7], 0
    %10 = vsyncpa [#allocation5], 0
    // Predicated region
    $region2: #{two_input_nn.1} parent=1 // pred_check
      _
    $region3: #{two_input_nn.1} parent=1 // pred_check_branch
      %12 = sbr.rel (0) target = $region5
    $region4: #{two_input_nn.1} parent=1 // pred_region
      %s14 = ssub.s32 128, 128
      %15 = vsyncadd [#allocation4], %s14
      %s17 = sshll.u32 [#allocation3], 4
      %s18 = int_to_ptr.vmem [resolvable:$true] %s17
      %20 = dma.hbm_to_vmem [thread:$0]  %s0, 128, %s18, [#allocation4]
    $region5: #{two_input_nn.1} parent=1 // pred_fallthru
      _
    // Predicated region
    $region6: #{two_input_nn.1} parent=1 // pred_check
      _
    $region7: #{two_input_nn.1} parent=1 // pred_check_branch
      %22 = sbr.rel (0) target = $region9
    $region8: #{two_input_nn.1} parent=1 // pred_region
      %s24 = ssub.s32 128, 128
      %25 = vsyncadd [#allocation7], %s24
      %s27 = sshll.u32 [#allocation6], 4
      %s28 = int_to_ptr.vmem [resolvable:$true] %s27
      %30 = dma.hbm_to_vmem [thread:$0]  %s1, 128, %s28, [#allocation7]
    $region9: #{two_input_nn.1} parent=1 // pred_fallthru
      _
    // Predicated region
    $region10: #{two_input_nn.1} parent=1 // pred_check
      _
    $region11: #{two_input_nn.1} parent=1 // pred_check_branch
      %32 = sbr.rel (0) target = $region13
    $region12: #{two_input_nn.1} parent=1 // pred_region
      %s34 = ssub.s32 512, 512
      %35 = vsyncadd [#allocation7], %s34
      %s36 = sshll.u32 [#allocation8], 4
      %s37 = int_to_ptr.vmem [resolvable:$true] %s36
      %42 = dma.hbm_to_vmem [thread:$0]  %s2, 512, %s37, [#allocation7], 128, 128, 8
    $region13: #{two_input_nn.1} parent=1 // pred_fallthru
      _
    // Predicated region
    $region14: #{two_input_nn.1} parent=1 // pred_check
      _
    $region15: #{two_input_nn.1} parent=1 // pred_check_branch
      %44 = sbr.rel (0) target = $region17
    $region16: #{two_input_nn.1} parent=1 // pred_region
      %45 = dma.done [#allocation4], 128
    $region17: #{two_input_nn.1} parent=1 // pred_fallthru
      _
    // Predicated region
    $region18: #{two_input_nn.1} parent=1 // pred_check
      _
    $region19: #{two_input_nn.1} parent=1 // pred_check_branch
      %47 = sbr.rel (0) target = $region21
    $region20: #{two_input_nn.1} parent=1 // pred_region
      %48 = dma.done [#allocation7], 128
    $region21: #{two_input_nn.1} parent=1 // pred_fallthru
      _
    // Predicated region
    $region22: #{two_input_nn.1} parent=1 // pred_check
      _
    $region23: #{two_input_nn.1} parent=1 // pred_check_branch
      %50 = sbr.rel (0) target = $region25
    $region24: #{two_input_nn.1} parent=1 // pred_region
      %51 = dma.done [#allocation7], 512
    $region25: #{two_input_nn.1} parent=1 // pred_fallthru
      _
    %v52 = vld [vmem:[#allocation3] sm:$0xff]
    %vm53 = vcmask 130048
    %54 = vst.msk [vmem:[#allocation2] sm:$0xff] %vm53, %v52
    %v55 = vld [vmem:[#allocation6] sm:$0xff]
    %57 = vrot.lane.b32.xlu0 %v55, 16
    %v58 = vpop.permute.xlu0 %57
    %vm60 = vcmask 261248
    %61 = vst.msk [vmem:[#allocation2] sm:$0xff] %vm60, %v58
    %v62 = vld [vmem:[#allocation2] sm:$0xff]
    %v63 = vld [vmem:[#allocation8] sm:$0xff]
    %v64 = vld [vmem:[#allocation8 + $0x8] sm:$0xff]
    %v65 = vld [vmem:[#allocation8 + $0x10] sm:$0xff]
    %v66 = vld [vmem:[#allocation8 + $0x18] sm:$0xff]
    %vm67 = vcmask 261120
    %v69 = vsel %vm67, %v62, 0
    %71 = vmatprep.subr.mxu0 0.0
    %72 = vmatpush1.msra.mxu0 %v63
    %73 = vmatprep.subr.mxu0 0.0
    %74 = vmatpush1.msra.mxu0 %v64
    %75 = vmatprep.subr.mxu0 0.0
    %76 = vmatpush1.msra.mxu0 %v65
    %77 = vmatprep.subr.mxu0 0.0
    %78 = vmatpush1.msra.mxu0 %v66
    %79 = vmatprep.subr.mxu0 0.0
    %80 = vmatpush1.msra.mxu0 0.0
    %81 = vmatprep.subr.mxu0 0.0
    %82 = vmatpush1.msra.mxu0 0.0
    %83 = vmatprep.subr.mxu0 0.0
    %84 = vmatpush1.msra.mxu0 0.0
    %85 = vmatprep.subr.mxu0 0.0
    %86 = vmatpush1.msra.mxu0 0.0
    %87 = vmatprep.subr.mxu0 0.0
    %88 = vmatpush1.msra.mxu0 0.0
    %89 = vmatprep.subr.mxu0 0.0
    %90 = vmatpush1.msra.mxu0 0.0
    %91 = vmatprep.subr.mxu0 0.0
    %92 = vmatpush1.msra.mxu0 0.0
    %93 = vmatprep.subr.mxu0 0.0
    %94 = vmatpush1.msra.mxu0 0.0
    %95 = vmatprep.subr.mxu0 0.0
    %96 = vmatpush1.msra.mxu0 0.0
    %97 = vmatprep.subr.mxu0 0.0
    %98 = vmatpush1.msra.mxu0 0.0
    %99 = vmatprep.subr.mxu0 0.0
    %100 = vmatpush1.msra.mxu0 0.0
    %101 = vmatprep.subr.mxu0 0.0
    %102 = vmatpush1.msra.mxu0 0.0
    %103 = vmatprep.subr.mxu0 0.0
    %104 = vmatpush1.msra.mxu0 0.0
    %105 = vmatprep.subr.mxu0 0.0
    %106 = vmatpush1.msra.mxu0 0.0
    %107 = vmatprep.subr.mxu0 0.0
    %108 = vmatpush1.msra.mxu0 0.0
    %109 = vmatprep.subr.mxu0 0.0
    %110 = vmatpush1.msra.mxu0 0.0
    %111 = vmatprep.subr.mxu0 0.0
    %112 = vmatpush1.msra.mxu0 0.0
    %113 = vmatprep.subr.mxu0 0.0
    %114 = vmatpush1.msra.mxu0 0.0
    %115 = vmatprep.subr.mxu0 0.0
    %116 = vmatpush1.msra.mxu0 0.0
    %117 = vmatprep.subr.mxu0 0.0
    %118 = vmatpush1.msra.mxu0 0.0
    %119 = vmatprep.subr.mxu0 0.0
    %120 = vmatpush1.msra.mxu0 0.0
    %121 = vmatprep.subr.mxu0 0.0
    %122 = vmatpush1.msra.mxu0 0.0
    %123 = vmatprep.subr.mxu0 0.0
    %124 = vmatpush1.msra.mxu0 0.0
    %125 = vmatprep.subr.mxu0 0.0
    %126 = vmatpush1.msra.mxu0 0.0
    %127 = vmatprep.subr.mxu0 0.0
    %128 = vmatpush1.msra.mxu0 0.0
    %129 = vmatprep.subr.mxu0 0.0
    %130 = vmatpush1.msra.mxu0 0.0
    %131 = vmatprep.subr.mxu0 0.0
    %132 = vmatpush1.msra.mxu0 0.0
    %133 = vmatprep.subr.mxu0 0.0
    %134 = vmatpush1.msra.mxu0 0.0
    %135 = vmatprep.mubr.f32.mxu0 0.0
    %136 = vmatmul.mubr.f32.gmra.mrb[0].mxu0 %v69
    %v137 = vpop.f32.mrb[0].mxu0
    %v138 = vadd.f32 0.0, %v137
    %v139 = vpop.f32.mrb[0].mxu0
    %140 = vdwg.mxu0
    %141 = vst [vmem:[#allocation9] sm:$0xff] %v138
    // Predicated region
    $region26: #{two_input_nn.1} parent=1 // pred_check
      _
    $region27: #{two_input_nn.1} parent=1 // pred_check_branch
      %143 = sbr.rel (0) target = $region29
    $region28: #{two_input_nn.1} parent=1 // pred_region
      %s145 = ssub.s32 128, 128
      %146 = vsyncadd [#allocation5], %s145
      %s148 = sshll.u32 [#allocation9], 4
      %s149 = int_to_ptr.vmem [resolvable:$true] %s148
      %151 = dma.vmem_to_hbm [thread:$0]  %s149, 128, %s3, [#allocation5]
    $region29: #{two_input_nn.1} parent=1 // pred_fallthru
      _
    // Predicated region
    $region30: #{two_input_nn.1} parent=1 // pred_check
      _
    $region31: #{two_input_nn.1} parent=1 // pred_check_branch
      %153 = sbr.rel (0) target = $region33
    $region32: #{two_input_nn.1} parent=1 // pred_region
      %154 = dma.done [#allocation5], 128
    $region33: #{two_input_nn.1} parent=1 // pred_fallthru
      _
    %155 = vsyncpa [#allocation4], 1
    %156 = vsyncpa [#allocation7], 1
    %157 = vsyncpa [#allocation5], 1

</llo_original>
